<compile_context>
chip_gen: v5e
topology: v5e:2x2
jax: 0.10.0
libtpu: 0.0.40
codegen_flags: <defaults>
</compile_context>

<pallas_src>
import jax
import jax.numpy as jnp
from jax.experimental import pallas as pl
from jax.experimental.pallas import tpu as pltpu


def _round_up(x, m):
    return ((x + m - 1) // m) * m


def neumf_kernel(
    ug_ref, ig_ref,              # GMF user/item embeddings  (Fg, TB)
    um_ref, im_ref,              # MLP user/item embeddings  (Fm, TB)
    gW_ref, gb_ref,              # gmf_affine (transposed): (Fg, Fg), (Fg, 1)
    w1u_ref, w1i_ref, b1_ref,    # mlp fc1 split (transposed): (Fm, Fm) x2, (Fm, 1)
    w2_ref, b2_ref,              # mlp fc2: (Fm//2, Fm), (Fm//2, 1)
    w3_ref, b3_ref,              # mlp fc3: (Fm//4, Fm//2), (Fm//4, 1)
    m1g_ref, m1m_ref, mb1_ref,   # mixing fc1 split: (D2, Fg), (D2, Fm//4), (D2, 1)
    m2_ref, mb2_ref,             # mixing fc2: (D4, D2), (D4, 1)
    m3_ref, mb3_ref,             # mixing fc3: (1, D4), (1, 1)
    out_ref,                     # lane-dense output row (1, TB)
):
    f32 = jnp.float32

    # Promote activations to f32 once per tile (keeps all VPU math in f32 so
    # bf16 storage never hits v5e's f32-only vector ALUs; no-op for f32 tables).
    ug = ug_ref[...].astype(f32)
    ig = ig_ref[...].astype(f32)
    um = um_ref[...].astype(f32)
    im = im_ref[...].astype(f32)

    # ---- GMF branch: element-wise product + affine ----
    prod = ug * ig                                                     # (Fg, TB)
    gmf = jnp.dot(gW_ref[...], prod, preferred_element_type=f32) + gb_ref[...]

    # ---- MLP branch ----
    # W1 @ concat([um, im]) == W1_user @ um + W1_item @ im   (concat avoided)
    h = (jnp.dot(w1u_ref[...], um, preferred_element_type=f32)
         + jnp.dot(w1i_ref[...], im, preferred_element_type=f32)
         + b1_ref[...])
    h = jnp.maximum(h, 0.0)
    h = jnp.maximum(
        jnp.dot(w2_ref[...], h, preferred_element_type=f32) + b2_ref[...], 0.0)
    h = jnp.maximum(
        jnp.dot(w3_ref[...], h, preferred_element_type=f32) + b3_ref[...], 0.0)

    # ---- Mixing layers ----
    # M1 @ concat([gmf, h]) == M1_gmf @ gmf + M1_mlp @ h
    r = (jnp.dot(m1g_ref[...], gmf, preferred_element_type=f32)
         + jnp.dot(m1m_ref[...], h, preferred_element_type=f32)
         + mb1_ref[...])
    r = jnp.maximum(r, 0.0)
    r = jnp.maximum(
        jnp.dot(m2_ref[...], r, preferred_element_type=f32) + mb2_ref[...], 0.0)

    logit = jnp.dot(m3_ref[...], r, preferred_element_type=f32) + mb3_ref[...]  # (1, TB)
    out_ref[...] = jax.nn.sigmoid(logit)


def make_params(key, num_users, num_items, num_factors_gmf, num_factors_mlp):
    """Deterministic synthetic parameter init (shapes match the PyTorch module)."""
    Fg, Fm = num_factors_gmf, num_factors_mlp
    input_dim = Fg + Fm // 4
    D2, D4 = input_dim // 2, input_dim // 4

    keys = jax.random.split(key, 32)
    k = iter(keys)

    def w(shape, scale=0.05):
        return (scale * jax.random.normal(next(k), shape)).astype(jnp.float32)

    params = dict(
        gmf_user_emb=w((num_users, Fg)),
        gmf_item_emb=w((num_items, Fg)),
        mlp_user_emb=w((num_users, Fm)),
        mlp_item_emb=w((num_items, Fm)),
        # Linear weights stored as (in, out); biases as (1, out).
        gmf_W=w((Fg, Fg)), gmf_b=w((1, Fg)),
        mlp_W1=w((2 * Fm, Fm)), mlp_b1=w((1, Fm)),
        mlp_W2=w((Fm, Fm // 2)), mlp_b2=w((1, Fm // 2)),
        mlp_W3=w((Fm // 2, Fm // 4)), mlp_b3=w((1, Fm // 4)),
        mix_W1=w((input_dim, D2)), mix_b1=w((1, D2)),
        mix_W2=w((D2, D4)), mix_b2=w((1, D4)),
        mix_W3=w((D4, 1)), mix_b3=w((1, 1)),
    )
    return params


def neumf_forward(params, user_indices, item_indices, num_factors_gmf,
                  *, max_batch_tile=2048):
    Fg = num_factors_gmf
    B = int(user_indices.shape[0])
    Fm = int(params["mlp_user_emb"].shape[-1])
    D1 = Fg + Fm // 4
    D2, D4 = D1 // 2, D1 // 4

    # Batch tile: as large as possible up to `max_batch_tile` (amortises the
    # ~0.35us per-grid-step overhead) while keeping double-buffered activation
    # tiles far below every generation's VMEM budget (v7x: 64 MiB physical,
    # 32 MiB default scoped).
    TB = max(8, min(_round_up(B, 8), max_batch_tile))
    num_tiles = pl.cdiv(B, TB)
    Bp = num_tiles * TB

    # Pad the (cheap) index vectors so the gathered activations are exactly tiled.
    if Bp != B:
        pad = Bp - B
        user_indices = jnp.pad(user_indices, (0, pad))
        item_indices = jnp.pad(item_indices, (0, pad))

    # Embedding lookups (gather) -- plain-JAX glue.  Rows are presented to the
    # kernel feature-major, (F, Bp), so the batch lives on the lane axis inside
    # the kernel.  allow_input_fusion below lets XLA fuse these producers into
    # the pallas_call operands.
    ug = jnp.take(params["gmf_user_emb"], user_indices, axis=0).T   # (Fg, Bp)
    ig = jnp.take(params["gmf_item_emb"], item_indices, axis=0).T
    um = jnp.take(params["mlp_user_emb"], user_indices, axis=0).T   # (Fm, Bp)
    im = jnp.take(params["mlp_item_emb"], item_indices, axis=0).T

    # Transposed weights (out, in) and column biases (out, 1); the splits of the
    # concat-facing matrices are static slices (negligible glue).
    # TODO(synk): second-order MXU win (block-diagonal weight packing to merge
    # the GMF affine with MLP fc1) intentionally not applied; kernel is HBM-bound.
    weights = (
        params["gmf_W"].T, params["gmf_b"].reshape(Fg, 1),
        params["mlp_W1"][:Fm, :].T, params["mlp_W1"][Fm:, :].T,
        params["mlp_b1"].reshape(Fm, 1),
        params["mlp_W2"].T, params["mlp_b2"].reshape(Fm // 2, 1),
        params["mlp_W3"].T, params["mlp_b3"].reshape(Fm // 4, 1),
        params["mix_W1"][:Fg, :].T, params["mix_W1"][Fg:, :].T,
        params["mix_b1"].reshape(D2, 1),
        params["mix_W2"].T, params["mix_b2"].reshape(D4, 1),
        params["mix_W3"].T, params["mix_b3"].reshape(1, 1),
    )
    acts = (ug, ig, um, im)

    def act_spec(feat):
        return pl.BlockSpec((feat, TB), lambda i: (0, i))

    def resident_spec(arr):
        # Constant index_map: DMA'd once, stays resident across grid steps.
        return pl.BlockSpec(arr.shape, lambda i: (0, 0))

    in_specs = ([act_spec(Fg), act_spec(Fg), act_spec(Fm), act_spec(Fm)]
                + [resident_spec(w) for w in weights])
    out_specs = pl.BlockSpec((1, TB), lambda i: (0, i))
    out_shape = jax.ShapeDtypeStruct((1, Bp), jnp.float32)

    # Advisory cost estimate: this kernel is HBM-bound on the embedding reads.
    act_itemsize = ug.dtype.itemsize
    weight_bytes = sum(int(w.size) * w.dtype.itemsize for w in weights)
    flops_per_row = 2 * (Fg * Fg + 2 * Fm * Fm + Fm * (Fm // 2)
                         + (Fm // 2) * (Fm // 4) + D1 * D2 + D2 * D4 + D4)
    cost = pl.CostEstimate(
        flops=Bp * flops_per_row,
        transcendentals=Bp,                        # final sigmoid
        bytes_accessed=Bp * (2 * Fg + 2 * Fm) * act_itemsize + Bp * 4 + weight_bytes,
    )

    # VMEM budget: double-buffered activation/output tiles + resident weights,
    # plus headroom; clamped to 32 MiB (<= scoped budget on every generation).
    act_tile_bytes = TB * (2 * Fg + 2 * Fm) * act_itemsize
    vmem_est = 3 * (act_tile_bytes + TB * 4) + 2 * weight_bytes + (4 << 20)
    vmem_limit = int(min(32 * 1024 * 1024, max(vmem_est, 8 * 1024 * 1024)))

    out = pl.pallas_call(
        neumf_kernel,
        out_shape=out_shape,
        grid=(num_tiles,),
        in_specs=in_specs,
        out_specs=out_specs,
        compiler_params=pltpu.CompilerParams(
            # Batch tiles are independent -> v7x's two TensorCores split them.
            dimension_semantics=("parallel",),
            vmem_limit_bytes=vmem_limit,
            # Allow XLA to fuse the embedding gathers into the four activation
            # operands (avoids an HBM round trip of the gathered rows).
            allow_input_fusion=[True] * len(acts) + [False] * len(weights),
        ),
        cost_estimate=cost,
    )(*acts, *weights)

    return jnp.squeeze(out.reshape(-1)[:B])   # matches PyTorch .squeeze()


def neumf_reference(params, user_indices, item_indices, num_factors_gmf):
    """Pure-JAX reference for correctness checking (f32 math on stored values)."""
    f32 = jnp.float32
    ug = jnp.take(params["gmf_user_emb"], user_indices, axis=0).astype(f32)
    ig = jnp.take(params["gmf_item_emb"], item_indices, axis=0).astype(f32)
    um = jnp.take(params["mlp_user_emb"], user_indices, axis=0).astype(f32)
    im = jnp.take(params["mlp_item_emb"], item_indices, axis=0).astype(f32)

    ratings_gmf = (ug * ig) @ params["gmf_W"] + params["gmf_b"]

    vec = jnp.concatenate([um, im], axis=-1)
    h = jax.nn.relu(vec @ params["mlp_W1"] + params["mlp_b1"])
    h = jax.nn.relu(h @ params["mlp_W2"] + params["mlp_b2"])
    h = jax.nn.relu(h @ params["mlp_W3"] + params["mlp_b3"])

    r = jnp.concatenate([ratings_gmf, h], axis=-1)
    r = jax.nn.relu(r @ params["mix_W1"] + params["mix_b1"])
    r = jax.nn.relu(r @ params["mix_W2"] + params["mix_b2"])
    out = jax.nn.sigmoid(r @ params["mix_W3"] + params["mix_b3"])
    return jnp.squeeze(out)


if __name__ == "__main__":
    # Small, self-consistent shapes.
    num_users, num_items = 64, 128
    num_factors_gmf, num_factors_mlp = 16, 32
    batch = 8

    key = jax.random.PRNGKey(0)
    k_params, k_u, k_i = jax.random.split(key, 3)

    params = make_params(k_params, num_users, num_items,
                         num_factors_gmf, num_factors_mlp)
    user_indices = jax.random.randint(k_u, (batch,), 0, num_users, dtype=jnp.int32)
    item_indices = jax.random.randint(k_i, (batch,), 0, num_items, dtype=jnp.int32)

    fwd = jax.jit(lambda p, u, i: neumf_forward(p, u, i, num_factors_gmf))

    # f32 parameter storage: exact semantics of the PyTorch module.
    out = jax.block_until_ready(fwd(params, user_indices, item_indices))
    ref = neumf_reference(params, user_indices, item_indices, num_factors_gmf)
    assert out.shape == (batch,), out.shape
    assert jnp.allclose(out, ref, atol=1e-5, rtol=1e-5), (out, ref)

    # bf16 embedding storage (halves HBM traffic on the memory-bound gather
    # path; in-kernel math stays f32, so it is safe on v5e's f32-only VPU too).
    params_bf16 = dict(params)
    for name in ("gmf_user_emb", "gmf_item_emb", "mlp_user_emb", "mlp_item_emb"):
        params_bf16[name] = params[name].astype(jnp.bfloat16)
    out_bf16 = jax.block_until_ready(fwd(params_bf16, user_indices, item_indices))
    ref_bf16 = neumf_reference(params_bf16, user_indices, item_indices,
                               num_factors_gmf)
    assert jnp.allclose(out_bf16, ref_bf16, atol=1e-4, rtol=1e-4), (out_bf16, ref_bf16)

    print("KERNEL_OK")
</pallas_src>

<mosaic_0001>
module attributes {stable_mosaic.version = 11 : i64} {
  func.func @neumf_kernel(%arg0: i32, %arg1: memref<16x8xf32, #tpu.memory_space<vmem>>, %arg2: memref<16x8xf32, #tpu.memory_space<vmem>>, %arg3: memref<32x8xf32, #tpu.memory_space<vmem>>, %arg4: memref<32x8xf32, #tpu.memory_space<vmem>>, %arg5: memref<16x16xf32, #tpu.memory_space<vmem>>, %arg6: memref<16x1xf32, #tpu.memory_space<vmem>>, %arg7: memref<32x32xf32, #tpu.memory_space<vmem>>, %arg8: memref<32x32xf32, #tpu.memory_space<vmem>>, %arg9: memref<32x1xf32, #tpu.memory_space<vmem>>, %arg10: memref<16x32xf32, #tpu.memory_space<vmem>>, %arg11: memref<16x1xf32, #tpu.memory_space<vmem>>, %arg12: memref<8x16xf32, #tpu.memory_space<vmem>>, %arg13: memref<8x1xf32, #tpu.memory_space<vmem>>, %arg14: memref<12x16xf32, #tpu.memory_space<vmem>>, %arg15: memref<12x8xf32, #tpu.memory_space<vmem>>, %arg16: memref<12x1xf32, #tpu.memory_space<vmem>>, %arg17: memref<6x12xf32, #tpu.memory_space<vmem>>, %arg18: memref<6x1xf32, #tpu.memory_space<vmem>>, %arg19: memref<1x6xf32, #tpu.memory_space<vmem>>, %arg20: memref<1x1xf32, #tpu.memory_space<vmem>>, %arg21: memref<1x8xf32, #tpu.memory_space<vmem>>) attributes {dimension_semantics = [#tpu.dimension_semantics<parallel>], iteration_bounds = array<i64: 1>, scalar_prefetch = 0 : i64, scratch_operands = 0 : i64, tpu.core_type = #tpu.core_type<tc>, window_params = [{transform_indices = @transform_0, window_bounds = array<i64: 16, 8>}, {transform_indices = @transform_1, window_bounds = array<i64: 16, 8>}, {transform_indices = @transform_2, window_bounds = array<i64: 32, 8>}, {transform_indices = @transform_3, window_bounds = array<i64: 32, 8>}, {pipeline_mode = #tpu.pipeline_mode<synchronous>, transform_indices = @transform_4, window_bounds = array<i64: 16, 16>}, {pipeline_mode = #tpu.pipeline_mode<synchronous>, transform_indices = @transform_5, window_bounds = array<i64: 16, 1>}, {pipeline_mode = #tpu.pipeline_mode<synchronous>, transform_indices = @transform_6, window_bounds = array<i64: 32, 32>}, {pipeline_mode = #tpu.pipeline_mode<synchronous>, transform_indices = @transform_7, window_bounds = array<i64: 32, 32>}, {pipeline_mode = #tpu.pipeline_mode<synchronous>, transform_indices = @transform_8, window_bounds = array<i64: 32, 1>}, {pipeline_mode = #tpu.pipeline_mode<synchronous>, transform_indices = @transform_9, window_bounds = array<i64: 16, 32>}, {pipeline_mode = #tpu.pipeline_mode<synchronous>, transform_indices = @transform_10, window_bounds = array<i64: 16, 1>}, {pipeline_mode = #tpu.pipeline_mode<synchronous>, transform_indices = @transform_11, window_bounds = array<i64: 8, 16>}, {pipeline_mode = #tpu.pipeline_mode<synchronous>, transform_indices = @transform_12, window_bounds = array<i64: 8, 1>}, {pipeline_mode = #tpu.pipeline_mode<synchronous>, transform_indices = @transform_13, window_bounds = array<i64: 12, 16>}, {pipeline_mode = #tpu.pipeline_mode<synchronous>, transform_indices = @transform_14, window_bounds = array<i64: 12, 8>}, {pipeline_mode = #tpu.pipeline_mode<synchronous>, transform_indices = @transform_15, window_bounds = array<i64: 12, 1>}, {pipeline_mode = #tpu.pipeline_mode<synchronous>, transform_indices = @transform_16, window_bounds = array<i64: 6, 12>}, {pipeline_mode = #tpu.pipeline_mode<synchronous>, transform_indices = @transform_17, window_bounds = array<i64: 6, 1>}, {pipeline_mode = #tpu.pipeline_mode<synchronous>, transform_indices = @transform_18, window_bounds = array<i64: 1, 6>}, {pipeline_mode = #tpu.pipeline_mode<synchronous>, transform_indices = @transform_19, window_bounds = array<i64: 1, 1>}, {transform_indices = @transform_20, window_bounds = array<i64: 1, 8>}]} {
    %c0 = arith.constant 0 : index
    %c0_0 = arith.constant 0 : index
    %0 = vector.load %arg1[%c0, %c0_0] : memref<16x8xf32, #tpu.memory_space<vmem>>, vector<16x8xf32>
    %c0_1 = arith.constant 0 : index
    %c0_2 = arith.constant 0 : index
    %1 = vector.load %arg2[%c0_1, %c0_2] : memref<16x8xf32, #tpu.memory_space<vmem>>, vector<16x8xf32>
    %c0_3 = arith.constant 0 : index
    %c0_4 = arith.constant 0 : index
    %2 = vector.load %arg3[%c0_3, %c0_4] : memref<32x8xf32, #tpu.memory_space<vmem>>, vector<32x8xf32>
    %c0_5 = arith.constant 0 : index
    %c0_6 = arith.constant 0 : index
    %3 = vector.load %arg4[%c0_5, %c0_6] : memref<32x8xf32, #tpu.memory_space<vmem>>, vector<32x8xf32>
    %4 = arith.mulf %0, %1 : vector<16x8xf32>
    %c0_7 = arith.constant 0 : index
    %c0_8 = arith.constant 0 : index
    %5 = vector.load %arg5[%c0_7, %c0_8] : memref<16x16xf32, #tpu.memory_space<vmem>>, vector<16x16xf32>
    %cst = arith.constant dense<0.000000e+00> : vector<16x8xf32>
    %6 = tpu.matmul %5, %4, %cst {dimension_numbers = #tpu.dot_dimension_numbers<[1], [0], [0], [1], [0, 0, 1, 1], [], []>} : vector<16x16xf32>, vector<16x8xf32>, vector<16x8xf32> -> vector<16x8xf32>
    %c0_9 = arith.constant 0 : index
    %c0_10 = arith.constant 0 : index
    %7 = vector.load %arg6[%c0_9, %c0_10] : memref<16x1xf32, #tpu.memory_space<vmem>>, vector<16x1xf32>
    %8 = vector.broadcast %7 : vector<16x1xf32> to vector<16x8xf32>
    %9 = arith.addf %6, %8 : vector<16x8xf32>
    %c0_11 = arith.constant 0 : index
    %c0_12 = arith.constant 0 : index
    %10 = vector.load %arg7[%c0_11, %c0_12] : memref<32x32xf32, #tpu.memory_space<vmem>>, vector<32x32xf32>
    %cst_13 = arith.constant dense<0.000000e+00> : vector<32x8xf32>
    %11 = tpu.matmul %10, %2, %cst_13 {dimension_numbers = #tpu.dot_dimension_numbers<[1], [0], [0], [1], [0, 0, 1, 1], [], []>} : vector<32x32xf32>, vector<32x8xf32>, vector<32x8xf32> -> vector<32x8xf32>
    %c0_14 = arith.constant 0 : index
    %c0_15 = arith.constant 0 : index
    %12 = vector.load %arg8[%c0_14, %c0_15] : memref<32x32xf32, #tpu.memory_space<vmem>>, vector<32x32xf32>
    %cst_16 = arith.constant dense<0.000000e+00> : vector<32x8xf32>
    %13 = tpu.matmul %12, %3, %cst_16 {dimension_numbers = #tpu.dot_dimension_numbers<[1], [0], [0], [1], [0, 0, 1, 1], [], []>} : vector<32x32xf32>, vector<32x8xf32>, vector<32x8xf32> -> vector<32x8xf32>
    %14 = arith.addf %11, %13 : vector<32x8xf32>
    %c0_17 = arith.constant 0 : index
    %c0_18 = arith.constant 0 : index
    %15 = vector.load %arg9[%c0_17, %c0_18] : memref<32x1xf32, #tpu.memory_space<vmem>>, vector<32x1xf32>
    %16 = vector.broadcast %15 : vector<32x1xf32> to vector<32x8xf32>
    %17 = arith.addf %14, %16 : vector<32x8xf32>
    %cst_19 = arith.constant 0.000000e+00 : f32
    %18 = vector.broadcast %cst_19 : f32 to vector<32x8xf32>
    %19 = arith.maximumf %17, %18 : vector<32x8xf32>
    %c0_20 = arith.constant 0 : index
    %c0_21 = arith.constant 0 : index
    %20 = vector.load %arg10[%c0_20, %c0_21] : memref<16x32xf32, #tpu.memory_space<vmem>>, vector<16x32xf32>
    %cst_22 = arith.constant dense<0.000000e+00> : vector<16x8xf32>
    %21 = tpu.matmul %20, %19, %cst_22 {dimension_numbers = #tpu.dot_dimension_numbers<[1], [0], [0], [1], [0, 0, 1, 1], [], []>} : vector<16x32xf32>, vector<32x8xf32>, vector<16x8xf32> -> vector<16x8xf32>
    %c0_23 = arith.constant 0 : index
    %c0_24 = arith.constant 0 : index
    %22 = vector.load %arg11[%c0_23, %c0_24] : memref<16x1xf32, #tpu.memory_space<vmem>>, vector<16x1xf32>
    %23 = vector.broadcast %22 : vector<16x1xf32> to vector<16x8xf32>
    %24 = arith.addf %21, %23 : vector<16x8xf32>
    %cst_25 = arith.constant 0.000000e+00 : f32
    %25 = vector.broadcast %cst_25 : f32 to vector<16x8xf32>
    %26 = arith.maximumf %24, %25 : vector<16x8xf32>
    %c0_26 = arith.constant 0 : index
    %c0_27 = arith.constant 0 : index
    %27 = vector.load %arg12[%c0_26, %c0_27] : memref<8x16xf32, #tpu.memory_space<vmem>>, vector<8x16xf32>
    %cst_28 = arith.constant dense<0.000000e+00> : vector<8x8xf32>
    %28 = tpu.matmul %27, %26, %cst_28 {dimension_numbers = #tpu.dot_dimension_numbers<[1], [0], [0], [1], [0, 0, 1, 1], [], []>} : vector<8x16xf32>, vector<16x8xf32>, vector<8x8xf32> -> vector<8x8xf32>
    %c0_29 = arith.constant 0 : index
    %c0_30 = arith.constant 0 : index
    %29 = vector.load %arg13[%c0_29, %c0_30] : memref<8x1xf32, #tpu.memory_space<vmem>>, vector<8x1xf32>
    %30 = vector.broadcast %29 : vector<8x1xf32> to vector<8x8xf32>
    %31 = arith.addf %28, %30 : vector<8x8xf32>
    %cst_31 = arith.constant 0.000000e+00 : f32
    %32 = vector.broadcast %cst_31 : f32 to vector<8x8xf32>
    %33 = arith.maximumf %31, %32 : vector<8x8xf32>
    %c0_32 = arith.constant 0 : index
    %c0_33 = arith.constant 0 : index
    %34 = vector.load %arg14[%c0_32, %c0_33] : memref<12x16xf32, #tpu.memory_space<vmem>>, vector<12x16xf32>
    %cst_34 = arith.constant dense<0.000000e+00> : vector<12x8xf32>
    %35 = tpu.matmul %34, %9, %cst_34 {dimension_numbers = #tpu.dot_dimension_numbers<[1], [0], [0], [1], [0, 0, 1, 1], [], []>} : vector<12x16xf32>, vector<16x8xf32>, vector<12x8xf32> -> vector<12x8xf32>
    %c0_35 = arith.constant 0 : index
    %c0_36 = arith.constant 0 : index
    %36 = vector.load %arg15[%c0_35, %c0_36] : memref<12x8xf32, #tpu.memory_space<vmem>>, vector<12x8xf32>
    %cst_37 = arith.constant dense<0.000000e+00> : vector<12x8xf32>
    %37 = tpu.matmul %36, %33, %cst_37 {dimension_numbers = #tpu.dot_dimension_numbers<[1], [0], [0], [1], [0, 0, 1, 1], [], []>} : vector<12x8xf32>, vector<8x8xf32>, vector<12x8xf32> -> vector<12x8xf32>
    %38 = arith.addf %35, %37 : vector<12x8xf32>
    %c0_38 = arith.constant 0 : index
    %c0_39 = arith.constant 0 : index
    %39 = vector.load %arg16[%c0_38, %c0_39] : memref<12x1xf32, #tpu.memory_space<vmem>>, vector<12x1xf32>
    %40 = vector.broadcast %39 : vector<12x1xf32> to vector<12x8xf32>
    %41 = arith.addf %38, %40 : vector<12x8xf32>
    %cst_40 = arith.constant 0.000000e+00 : f32
    %42 = vector.broadcast %cst_40 : f32 to vector<12x8xf32>
    %43 = arith.maximumf %41, %42 : vector<12x8xf32>
    %c0_41 = arith.constant 0 : index
    %c0_42 = arith.constant 0 : index
    %44 = vector.load %arg17[%c0_41, %c0_42] : memref<6x12xf32, #tpu.memory_space<vmem>>, vector<6x12xf32>
    %cst_43 = arith.constant dense<0.000000e+00> : vector<6x8xf32>
    %45 = tpu.matmul %44, %43, %cst_43 {dimension_numbers = #tpu.dot_dimension_numbers<[1], [0], [0], [1], [0, 0, 1, 1], [], []>} : vector<6x12xf32>, vector<12x8xf32>, vector<6x8xf32> -> vector<6x8xf32>
    %c0_44 = arith.constant 0 : index
    %c0_45 = arith.constant 0 : index
    %46 = vector.load %arg18[%c0_44, %c0_45] : memref<6x1xf32, #tpu.memory_space<vmem>>, vector<6x1xf32>
    %47 = vector.broadcast %46 : vector<6x1xf32> to vector<6x8xf32>
    %48 = arith.addf %45, %47 : vector<6x8xf32>
    %cst_46 = arith.constant 0.000000e+00 : f32
    %49 = vector.broadcast %cst_46 : f32 to vector<6x8xf32>
    %50 = arith.maximumf %48, %49 : vector<6x8xf32>
    %c0_47 = arith.constant 0 : index
    %c0_48 = arith.constant 0 : index
    %51 = vector.load %arg19[%c0_47, %c0_48] : memref<1x6xf32, #tpu.memory_space<vmem>>, vector<1x6xf32>
    %cst_49 = arith.constant dense<0.000000e+00> : vector<1x8xf32>
    %52 = tpu.matmul %51, %50, %cst_49 {dimension_numbers = #tpu.dot_dimension_numbers<[1], [0], [0], [1], [0, 0, 1, 1], [], []>} : vector<1x6xf32>, vector<6x8xf32>, vector<1x8xf32> -> vector<1x8xf32>
    %c0_50 = arith.constant 0 : index
    %c0_51 = arith.constant 0 : index
    %53 = vector.load %arg20[%c0_50, %c0_51] : memref<1x1xf32, #tpu.memory_space<vmem>>, vector<1x1xf32>
    %54 = vector.broadcast %53 : vector<1x1xf32> to vector<1x8xf32>
    %55 = arith.addf %52, %54 : vector<1x8xf32>
    %56 = arith.negf %55 : vector<1x8xf32>
    %57 = math.exp %56 : vector<1x8xf32>
    %cst_52 = arith.constant 1.000000e+00 : f32
    %58 = vector.broadcast %cst_52 : f32 to vector<1x8xf32>
    %59 = arith.addf %58, %57 : vector<1x8xf32>
    %60 = arith.divf %58, %59 : vector<1x8xf32>
    %c0_53 = arith.constant 0 : index
    %c0_54 = arith.constant 0 : index
    %61 = vector.load %arg21[%c0_53, %c0_54] : memref<1x8xf32, #tpu.memory_space<vmem>>, vector<1x8xf32>
    tpu.vector_store %arg21[%c0_53, %c0_54], %60 {strides = array<i32>} : memref<1x8xf32, #tpu.memory_space<vmem>>, vector<1x8xf32>,
    return
  }
  func.func @transform_0(%arg0: i32) -> (i32, i32) {
    %c0_i32 = arith.constant 0 : i32
    %c0_i32_0 = arith.constant 0 : i32
    return %c0_i32, %arg0 : i32, i32
  }
  func.func @transform_1(%arg0: i32) -> (i32, i32) {
    %c0_i32 = arith.constant 0 : i32
    %c0_i32_0 = arith.constant 0 : i32
    return %c0_i32, %arg0 : i32, i32
  }
  func.func @transform_2(%arg0: i32) -> (i32, i32) {
    %c0_i32 = arith.constant 0 : i32
    %c0_i32_0 = arith.constant 0 : i32
    return %c0_i32, %arg0 : i32, i32
  }
  func.func @transform_3(%arg0: i32) -> (i32, i32) {
    %c0_i32 = arith.constant 0 : i32
    %c0_i32_0 = arith.constant 0 : i32
    return %c0_i32, %arg0 : i32, i32
  }
  func.func @transform_4(%arg0: i32) -> (i32, i32) {
    %c0_i32 = arith.constant 0 : i32
    %c0_i32_0 = arith.constant 0 : i32
    %c0_i32_1 = arith.constant 0 : i32
    return %c0_i32, %c0_i32_0 : i32, i32
  }
  func.func @transform_5(%arg0: i32) -> (i32, i32) {
    %c0_i32 = arith.constant 0 : i32
    %c0_i32_0 = arith.constant 0 : i32
    %c0_i32_1 = arith.constant 0 : i32
    return %c0_i32, %c0_i32_0 : i32, i32
  }
  func.func @transform_6(%arg0: i32) -> (i32, i32) {
    %c0_i32 = arith.constant 0 : i32
    %c0_i32_0 = arith.constant 0 : i32
    %c0_i32_1 = arith.constant 0 : i32
    return %c0_i32, %c0_i32_0 : i32, i32
  }
  func.func @transform_7(%arg0: i32) -> (i32, i32) {
    %c0_i32 = arith.constant 0 : i32
    %c0_i32_0 = arith.constant 0 : i32
    %c0_i32_1 = arith.constant 0 : i32
    return %c0_i32, %c0_i32_0 : i32, i32
  }
  func.func @transform_8(%arg0: i32) -> (i32, i32) {
    %c0_i32 = arith.constant 0 : i32
    %c0_i32_0 = arith.constant 0 : i32
    %c0_i32_1 = arith.constant 0 : i32
    return %c0_i32, %c0_i32_0 : i32, i32
  }
  func.func @transform_9(%arg0: i32) -> (i32, i32) {
    %c0_i32 = arith.constant 0 : i32
    %c0_i32_0 = arith.constant 0 : i32
    %c0_i32_1 = arith.constant 0 : i32
    return %c0_i32, %c0_i32_0 : i32, i32
  }
  func.func @transform_10(%arg0: i32) -> (i32, i32) {
    %c0_i32 = arith.constant 0 : i32
    %c0_i32_0 = arith.constant 0 : i32
    %c0_i32_1 = arith.constant 0 : i32
    return %c0_i32, %c0_i32_0 : i32, i32
  }
  func.func @transform_11(%arg0: i32) -> (i32, i32) {
    %c0_i32 = arith.constant 0 : i32
    %c0_i32_0 = arith.constant 0 : i32
    %c0_i32_1 = arith.constant 0 : i32
    return %c0_i32, %c0_i32_0 : i32, i32
  }
  func.func @transform_12(%arg0: i32) -> (i32, i32) {
    %c0_i32 = arith.constant 0 : i32
    %c0_i32_0 = arith.constant 0 : i32
    %c0_i32_1 = arith.constant 0 : i32
    return %c0_i32, %c0_i32_0 : i32, i32
  }
  func.func @transform_13(%arg0: i32) -> (i32, i32) {
    %c0_i32 = arith.constant 0 : i32
    %c0_i32_0 = arith.constant 0 : i32
    %c0_i32_1 = arith.constant 0 : i32
    return %c0_i32, %c0_i32_0 : i32, i32
  }
  func.func @transform_14(%arg0: i32) -> (i32, i32) {
    %c0_i32 = arith.constant 0 : i32
    %c0_i32_0 = arith.constant 0 : i32
    %c0_i32_1 = arith.constant 0 : i32
    return %c0_i32, %c0_i32_0 : i32, i32
  }
  func.func @transform_15(%arg0: i32) -> (i32, i32) {
    %c0_i32 = arith.constant 0 : i32
    %c0_i32_0 = arith.constant 0 : i32
    %c0_i32_1 = arith.constant 0 : i32
    return %c0_i32, %c0_i32_0 : i32, i32
  }
  func.func @transform_16(%arg0: i32) -> (i32, i32) {
    %c0_i32 = arith.constant 0 : i32
    %c0_i32_0 = arith.constant 0 : i32
    %c0_i32_1 = arith.constant 0 : i32
    return %c0_i32, %c0_i32_0 : i32, i32
  }
  func.func @transform_17(%arg0: i32) -> (i32, i32) {
    %c0_i32 = arith.constant 0 : i32
    %c0_i32_0 = arith.constant 0 : i32
    %c0_i32_1 = arith.constant 0 : i32
    return %c0_i32, %c0_i32_0 : i32, i32
  }
  func.func @transform_18(%arg0: i32) -> (i32, i32) {
    %c0_i32 = arith.constant 0 : i32
    %c0_i32_0 = arith.constant 0 : i32
    %c0_i32_1 = arith.constant 0 : i32
    return %c0_i32, %c0_i32_0 : i32, i32
  }
  func.func @transform_19(%arg0: i32) -> (i32, i32) {
    %c0_i32 = arith.constant 0 : i32
    %c0_i32_0 = arith.constant 0 : i32
    %c0_i32_1 = arith.constant 0 : i32
    return %c0_i32, %c0_i32_0 : i32, i32
  }
  func.func @transform_20(%arg0: i32) -> (i32, i32) {
    %c0_i32 = arith.constant 0 : i32
    %c0_i32_0 = arith.constant 0 : i32
    return %c0_i32, %arg0 : i32, i32
  }
}

</mosaic_0001>

<llo_original>
// kernel: _lambda_.2
$region0: #{_lambda_.2}
  #allocation0 [shape = 'u32[]', space=smem, size = 0x4, offset = 0x4, fixed_abs, tag = 'smem constant byte address 0x4 - core index']
  #allocation1 [shape = 'u32[72,128]{1,0:T(1,128)}', space=vmem, size = 0x9000, scoped, tag = 'internal scratch']
  #allocation2 [shape = 'f32[1,1]{1,0:T(1,128)S(1)}', space=vmem, size = 0x200, scoped, tag = 'scoped memory for _lambda_.2']
  %s0 = inlined_call_operand.vmem [shape: f32[16,16], index: 0, kind: input, shape index: {}]
  %s1 = inlined_call_operand.vmem [shape: f32[16,1], index: 1, kind: input, shape index: {}]
  %s2 = inlined_call_operand.vmem [shape: f32[32,32], index: 2, kind: input, shape index: {}]
  %s3 = inlined_call_operand.vmem [shape: f32[32,32], index: 3, kind: input, shape index: {}]
  %s4 = inlined_call_operand.vmem [shape: f32[32,1], index: 4, kind: input, shape index: {}]
  %s5 = inlined_call_operand.vmem [shape: f32[16,32], index: 5, kind: input, shape index: {}]
  %s6 = inlined_call_operand.vmem [shape: f32[16,1], index: 6, kind: input, shape index: {}]
  %s7 = inlined_call_operand.vmem [shape: f32[8,16], index: 7, kind: input, shape index: {}]
  %s8 = inlined_call_operand.vmem [shape: f32[8,1], index: 8, kind: input, shape index: {}]
  %s9 = inlined_call_operand.vmem [shape: f32[12,16], index: 9, kind: input, shape index: {}]
  %s10 = inlined_call_operand.vmem [shape: f32[12,8], index: 10, kind: input, shape index: {}]
  %s11 = inlined_call_operand.vmem [shape: f32[12,1], index: 11, kind: input, shape index: {}]
  %s12 = inlined_call_operand.vmem [shape: f32[6,12], index: 12, kind: input, shape index: {}]
  %s13 = inlined_call_operand.vmem [shape: f32[6,1], index: 13, kind: input, shape index: {}]
  %s14 = inlined_call_operand.vmem [shape: f32[1,6], index: 14, kind: input, shape index: {}]
  %s15 = inlined_call_operand.<no memory space> [shape: f32[1,1], index: 15, kind: input, shape index: {}]
  %s16 = inlined_call_operand.vmem [shape: f32[8,32], index: 16, kind: input, shape index: {}]
  %s17 = inlined_call_operand.vmem [shape: f32[8,32], index: 17, kind: input, shape index: {}]
  %s18 = inlined_call_operand.<no memory space> [shape: f32[], index: 18, kind: input, shape index: {}]
  %s19 = inlined_call_operand.vmem [shape: f32[8,16], index: 19, kind: input, shape index: {}]
  %s20 = inlined_call_operand.vmem [shape: f32[8,16], index: 20, kind: input, shape index: {}]
  %s21 = inlined_call_operand.vmem [shape: pred[8], index: 21, kind: input, shape index: {}]
  %s22 = inlined_call_operand.vmem [shape: pred[8], index: 22, kind: input, shape index: {}]
  %s23 = inlined_call_operand.hbm [shape: f32[1,8], index: 23, kind: output, shape index: {}]
  %s24 = sld [smem:[#allocation0]]
  $region106: #{_lambda_.2} parent=0
    _
  %s26 = ssub.s32 1, %s24
  %s27 = scalar_select 0, %s26, %s24
  %v28 = vstv %s18
  %v29 = vstv %s18
  %v30 = vstv %s18
  %v31 = vstv %s18
  %v32 = vstv %s15
  %33 = vst [vmem:[#allocation2] sm:$0x1] %v32
  $region1: #{_lambda_.2} parent=0
    #allocation3 [shape = 'u8[512]{0}', space=vmem, size = 0x400, scoped, tag = 'output window, operand 0, single buffered']
    #allocation4 [shape = 's32[1]{0}', space=sflag, size = 0x4, scoped, tag = 'scoped memory for _lambda_.2']
    #allocation5 [shape = 'u8[8192]{0}', space=vmem, size = 0x2000, dematerialized = true, scoped, tag = 'FusionAdapter Buffer %fusion.6 = f32[16,8]{1,0:T(8,128)} fusion(%param_20.10, %param_18.9, %param_22.10), kind=kLoop, calls=%fused_computation.12.clone, metadata={op_name="jit(<lambda>)/jit(_take)/select_n" stack_frame_id=2}']
    #allocation6 [shape = 'u8[8192]{0}', space=vmem, size = 0x2000, dematerialized = true, scoped, tag = 'FusionAdapter Buffer %fusion.5 = f32[16,8]{1,0:T(8,128)} fusion(%param_19.10, %param_18.9, %param_21.11), kind=kLoop, calls=%fused_computation.11.clone, metadata={op_name="jit(<lambda>)/jit(_take)/select_n" stack_frame_id=11}']
    #allocation7 [shape = 'u8[16384]{0}', space=vmem, size = 0x4000, dematerialized = true, scoped, tag = 'FusionAdapter Buffer %fusion.2 = f32[32,8]{1,0:T(8,128)} fusion(%param_17.6, %param_18.9, %param_22.10), kind=kLoop, calls=%fused_computation.6.clone, metadata={op_name="jit(<lambda>)/jit(_take)/select_n" stack_frame_id=13}']
    #allocation8 [shape = 'u8[16384]{0}', space=vmem, size = 0x4000, dematerialized = true, scoped, tag = 'FusionAdapter Buffer %fusion.1 = f32[32,8]{1,0:T(8,128)} fusion(%param_16.5, %param_18.9, %param_21.11), kind=kLoop, calls=%fused_computation.5.clone, metadata={op_name="jit(<lambda>)/jit(_take)/select_n" stack_frame_id=15}']
    %34 = vsyncpa [#allocation4], 0
    // Predicated region
    $region2: #{_lambda_.2} parent=1 // pred_check
      _
    $region3: #{_lambda_.2} parent=1 // pred_check_branch
      %36 = sbr.rel (0) target = $region5
    $region4: #{_lambda_.2} parent=1 // pred_region
      _
    $region5: #{_lambda_.2} parent=1 // pred_fallthru
      _
    // Predicated region
    $region6: #{_lambda_.2} parent=1 // pred_check
      _
    $region7: #{_lambda_.2} parent=1 // pred_check_branch
      %38 = sbr.rel (0) target = $region9
    $region8: #{_lambda_.2} parent=1 // pred_region
      _
    $region9: #{_lambda_.2} parent=1 // pred_fallthru
      _
    // Predicated region
    $region10: #{_lambda_.2} parent=1 // pred_check
      _
    $region11: #{_lambda_.2} parent=1 // pred_check_branch
      %40 = sbr.rel (0) target = $region13
    $region12: #{_lambda_.2} parent=1 // pred_region
      _
    $region13: #{_lambda_.2} parent=1 // pred_fallthru
      _
    // Predicated region
    $region14: #{_lambda_.2} parent=1 // pred_check
      _
    $region15: #{_lambda_.2} parent=1 // pred_check_branch
      %42 = sbr.rel (0) target = $region17
    $region16: #{_lambda_.2} parent=1 // pred_region
      _
    $region17: #{_lambda_.2} parent=1 // pred_fallthru
      _
    // Predicated region
    $region18: #{_lambda_.2} parent=1 // pred_check
      _
    $region19: #{_lambda_.2} parent=1 // pred_check_branch
      %44 = sbr.rel (0) target = $region21
    $region20: #{_lambda_.2} parent=1 // pred_region
      _
    $region21: #{_lambda_.2} parent=1 // pred_fallthru
      _
    // Predicated region
    $region22: #{_lambda_.2} parent=1 // pred_check
      _
    $region23: #{_lambda_.2} parent=1 // pred_check_branch
      %46 = sbr.rel (0) target = $region25
    $region24: #{_lambda_.2} parent=1 // pred_region
      _
    $region25: #{_lambda_.2} parent=1 // pred_fallthru
      _
    // Predicated region
    $region26: #{_lambda_.2} parent=1 // pred_check
      _
    $region27: #{_lambda_.2} parent=1 // pred_check_branch
      %48 = sbr.rel (0) target = $region29
    $region28: #{_lambda_.2} parent=1 // pred_region
      _
    $region29: #{_lambda_.2} parent=1 // pred_fallthru
      _
    // Predicated region
    $region30: #{_lambda_.2} parent=1 // pred_check
      _
    $region31: #{_lambda_.2} parent=1 // pred_check_branch
      %50 = sbr.rel (0) target = $region33
    $region32: #{_lambda_.2} parent=1 // pred_region
      _
    $region33: #{_lambda_.2} parent=1 // pred_fallthru
      _
    // Predicated region
    $region34: #{_lambda_.2} parent=1 // pred_check
      _
    $region35: #{_lambda_.2} parent=1 // pred_check_branch
      %52 = sbr.rel (0) target = $region37
    $region36: #{_lambda_.2} parent=1 // pred_region
      _
    $region37: #{_lambda_.2} parent=1 // pred_fallthru
      _
    // Predicated region
    $region38: #{_lambda_.2} parent=1 // pred_check
      _
    $region39: #{_lambda_.2} parent=1 // pred_check_branch
      %54 = sbr.rel (0) target = $region41
    $region40: #{_lambda_.2} parent=1 // pred_region
      _
    $region41: #{_lambda_.2} parent=1 // pred_fallthru
      _
    // Predicated region
    $region42: #{_lambda_.2} parent=1 // pred_check
      _
    $region43: #{_lambda_.2} parent=1 // pred_check_branch
      %56 = sbr.rel (0) target = $region45
    $region44: #{_lambda_.2} parent=1 // pred_region
      _
    $region45: #{_lambda_.2} parent=1 // pred_fallthru
      _
    // Predicated region
    $region46: #{_lambda_.2} parent=1 // pred_check
      _
    $region47: #{_lambda_.2} parent=1 // pred_check_branch
      %58 = sbr.rel (0) target = $region49
    $region48: #{_lambda_.2} parent=1 // pred_region
      _
    $region49: #{_lambda_.2} parent=1 // pred_fallthru
      _
    // Predicated region
    $region50: #{_lambda_.2} parent=1 // pred_check
      _
    $region51: #{_lambda_.2} parent=1 // pred_check_branch
      %60 = sbr.rel (0) target = $region53
    $region52: #{_lambda_.2} parent=1 // pred_region
      _
    $region53: #{_lambda_.2} parent=1 // pred_fallthru
      _
    // Predicated region
    $region54: #{_lambda_.2} parent=1 // pred_check
      _
    $region55: #{_lambda_.2} parent=1 // pred_check_branch
      %62 = sbr.rel (0) target = $region57
    $region56: #{_lambda_.2} parent=1 // pred_region
      _
    $region57: #{_lambda_.2} parent=1 // pred_fallthru
      _
    // Predicated region
    $region58: #{_lambda_.2} parent=1 // pred_check
      _
    $region59: #{_lambda_.2} parent=1 // pred_check_branch
      %64 = sbr.rel (0) target = $region61
    $region60: #{_lambda_.2} parent=1 // pred_region
      _
    $region61: #{_lambda_.2} parent=1 // pred_fallthru
      _
    // Predicated region
    $region62: #{_lambda_.2} parent=1 // pred_check
      _
    $region63: #{_lambda_.2} parent=1 // pred_check_branch
      %66 = sbr.rel (0) target = $region65
    $region64: #{_lambda_.2} parent=1 // pred_region
      _
    $region65: #{_lambda_.2} parent=1 // pred_fallthru
      _
    // Predicated region
    $region66: #{_lambda_.2} parent=1 // pred_check
      _
    $region67: #{_lambda_.2} parent=1 // pred_check_branch
      %68 = sbr.rel (0) target = $region69
    $region68: #{_lambda_.2} parent=1 // pred_region
      _
    $region69: #{_lambda_.2} parent=1 // pred_fallthru
      _
    // Predicated region
    $region70: #{_lambda_.2} parent=1 // pred_check
      _
    $region71: #{_lambda_.2} parent=1 // pred_check_branch
      %70 = sbr.rel (0) target = $region73
    $region72: #{_lambda_.2} parent=1 // pred_region
      _
    $region73: #{_lambda_.2} parent=1 // pred_fallthru
      _
    // Predicated region
    $region74: #{_lambda_.2} parent=1 // pred_check
      _
    $region75: #{_lambda_.2} parent=1 // pred_check_branch
      %72 = sbr.rel (0) target = $region77
    $region76: #{_lambda_.2} parent=1 // pred_region
      _
    $region77: #{_lambda_.2} parent=1 // pred_fallthru
      _
    // Predicated region
    $region78: #{_lambda_.2} parent=1 // pred_check
      _
    $region79: #{_lambda_.2} parent=1 // pred_check_branch
      %74 = sbr.rel (0) target = $region81
    $region80: #{_lambda_.2} parent=1 // pred_region
      _
    $region81: #{_lambda_.2} parent=1 // pred_fallthru
      _
    // Predicated region
    $region82: #{_lambda_.2} parent=1 // pred_check
      _
    $region83: #{_lambda_.2} parent=1 // pred_check_branch
      %76 = sbr.rel (0) target = $region85
    $region84: #{_lambda_.2} parent=1 // pred_region
      _
    $region85: #{_lambda_.2} parent=1 // pred_fallthru
      _
    // Predicated region
    $region86: #{_lambda_.2} parent=1 // pred_check
      _
    $region87: #{_lambda_.2} parent=1 // pred_check_branch
      %78 = sbr.rel (0) target = $region89
    $region88: #{_lambda_.2} parent=1 // pred_region
      _
    $region89: #{_lambda_.2} parent=1 // pred_fallthru
      _
    // Predicated region
    $region90: #{_lambda_.2} parent=1 // pred_check
      _
    $region91: #{_lambda_.2} parent=1 // pred_check_branch
      %80 = sbr.rel (0) target = $region93
    $region92: #{_lambda_.2} parent=1 // pred_region
      _
    $region93: #{_lambda_.2} parent=1 // pred_fallthru
      _
    // Predicated region
    $region94: #{_lambda_.2} parent=1 // pred_check
      _
    $region95: #{_lambda_.2} parent=1 // pred_check_branch
      %82 = sbr.rel (0) target = $region97
    $region96: #{_lambda_.2} parent=1 // pred_region
      _
    $region97: #{_lambda_.2} parent=1 // pred_fallthru
      _
    %v83 = vld [vmem:[%s20] sm:$0xff]
    %v84 = vld [vmem:[%s22] ss:$0 sm:$0xff]
    %v86 = vshra.s32 %v84, 0
    %v87 = vand.u32 %v86, 255
    %88 = xla_tuple %v87, %v83, %v28
    %89 = xla_tuple %88
    %vm90 = vcmp.ne.s32.totalorder %v87, 0
    %v91 = vsel %vm90, %v83, %v28
    %92 = xla_tuple %v91
    %s94 = ssub.s32 256, 1
    %95 = vst [vmem:[#allocation5] sm:%s94] %v91
    %s96 = scalar_lea.vmem %s20, 8
    %v97 = vld [vmem:[%s96] sm:$0xff]
    %98 = xla_tuple %v87, %v97, %v28
    %99 = xla_tuple %98
    %vm100 = vcmp.ne.s32.totalorder %v87, 0
    %v101 = vsel %vm100, %v97, %v28
    %102 = xla_tuple %v101
    %s103 = scalar_lea.vmem [#allocation5], 8
    %s105 = ssub.s32 256, 1
    %106 = vst [vmem:[%s103] sm:%s105] %v101
    %v107 = vld [vmem:[%s19] sm:$0xff]
    %v108 = vld [vmem:[%s21] ss:$0 sm:$0xff]
    %v110 = vshra.s32 %v108, 0
    %v111 = vand.u32 %v110, 255
    %112 = xla_tuple %v111, %v107, %v29
    %113 = xla_tuple %112
    %vm114 = vcmp.ne.s32.totalorder %v111, 0
    %v115 = vsel %vm114, %v107, %v29
    %116 = xla_tuple %v115
    %s118 = ssub.s32 256, 1
    %119 = vst [vmem:[#allocation6] sm:%s118] %v115
    %s120 = scalar_lea.vmem %s19, 8
    %v121 = vld [vmem:[%s120] sm:$0xff]
    %122 = xla_tuple %v111, %v121, %v29
    %123 = xla_tuple %122
    %vm124 = vcmp.ne.s32.totalorder %v111, 0
    %v125 = vsel %vm124, %v121, %v29
    %126 = xla_tuple %v125
    %s127 = scalar_lea.vmem [#allocation6], 8
    %s129 = ssub.s32 256, 1
    %130 = vst [vmem:[%s127] sm:%s129] %v125
    %v131 = vld [vmem:[%s17] sm:$0xff]
    %v132 = vld [vmem:[%s22] ss:$0 sm:$0xff]
    %v134 = vshra.s32 %v132, 0
    %v135 = vand.u32 %v134, 255
    %136 = xla_tuple %v135, %v131, %v30
    %137 = xla_tuple %136
    %vm138 = vcmp.ne.s32.totalorder %v135, 0
    %v139 = vsel %vm138, %v131, %v30
    %140 = xla_tuple %v139
    %s142 = ssub.s32 256, 1
    %143 = vst [vmem:[#allocation7] sm:%s142] %v139
    %s144 = scalar_lea.vmem %s17, 8
    %v145 = vld [vmem:[%s144] sm:$0xff]
    %146 = xla_tuple %v135, %v145, %v30
    %147 = xla_tuple %146
    %vm148 = vcmp.ne.s32.totalorder %v135, 0
    %v149 = vsel %vm148, %v145, %v30
    %150 = xla_tuple %v149
    %s151 = scalar_lea.vmem [#allocation7], 8
    %s153 = ssub.s32 256, 1
    %154 = vst [vmem:[%s151] sm:%s153] %v149
    %s155 = scalar_lea.vmem %s17, 16
    %v156 = vld [vmem:[%s155] sm:$0xff]
    %157 = xla_tuple %v135, %v156, %v30
    %158 = xla_tuple %157
    %vm159 = vcmp.ne.s32.totalorder %v135, 0
    %v160 = vsel %vm159, %v156, %v30
    %161 = xla_tuple %v160
    %s162 = scalar_lea.vmem [#allocation7], 16
    %s164 = ssub.s32 256, 1
    %165 = vst [vmem:[%s162] sm:%s164] %v160
    %s166 = scalar_lea.vmem %s17, 24
    %v167 = vld [vmem:[%s166] sm:$0xff]
    %168 = xla_tuple %v135, %v167, %v30
    %169 = xla_tuple %168
    %vm170 = vcmp.ne.s32.totalorder %v135, 0
    %v171 = vsel %vm170, %v167, %v30
    %172 = xla_tuple %v171
    %s173 = scalar_lea.vmem [#allocation7], 24
    %s175 = ssub.s32 256, 1
    %176 = vst [vmem:[%s173] sm:%s175] %v171
    %v177 = vld [vmem:[%s16] sm:$0xff]
    %v178 = vld [vmem:[%s21] ss:$0 sm:$0xff]
    %v180 = vshra.s32 %v178, 0
    %v181 = vand.u32 %v180, 255
    %182 = xla_tuple %v181, %v177, %v31
    %183 = xla_tuple %182
    %vm184 = vcmp.ne.s32.totalorder %v181, 0
    %v185 = vsel %vm184, %v177, %v31
    %186 = xla_tuple %v185
    %s188 = ssub.s32 256, 1
    %189 = vst [vmem:[#allocation8] sm:%s188] %v185
    %s190 = scalar_lea.vmem %s16, 8
    %v191 = vld [vmem:[%s190] sm:$0xff]
    %192 = xla_tuple %v181, %v191, %v31
    %193 = xla_tuple %192
    %vm194 = vcmp.ne.s32.totalorder %v181, 0
    %v195 = vsel %vm194, %v191, %v31
    %196 = xla_tuple %v195
    %s197 = scalar_lea.vmem [#allocation8], 8
    %s199 = ssub.s32 256, 1
    %200 = vst [vmem:[%s197] sm:%s199] %v195
    %s201 = scalar_lea.vmem %s16, 16
    %v202 = vld [vmem:[%s201] sm:$0xff]
    %203 = xla_tuple %v181, %v202, %v31
    %204 = xla_tuple %203
    %vm205 = vcmp.ne.s32.totalorder %v181, 0
    %v206 = vsel %vm205, %v202, %v31
    %207 = xla_tuple %v206
    %s208 = scalar_lea.vmem [#allocation8], 16
    %s210 = ssub.s32 256, 1
    %211 = vst [vmem:[%s208] sm:%s210] %v206
    %s212 = scalar_lea.vmem %s16, 24
    %v213 = vld [vmem:[%s212] sm:$0xff]
    %214 = xla_tuple %v181, %v213, %v31
    %215 = xla_tuple %214
    %vm216 = vcmp.ne.s32.totalorder %v181, 0
    %v217 = vsel %vm216, %v213, %v31
    %218 = xla_tuple %v217
    %s219 = scalar_lea.vmem [#allocation8], 24
    %s221 = ssub.s32 256, 1
    %222 = vst [vmem:[%s219] sm:%s221] %v217
    %v223 = vld [vmem:[#allocation5] sm:$0xff]
    %v224 = vld [vmem:[#allocation5 + $0x8] sm:$0xff]
    %v225 = vld [vmem:[#allocation6] sm:$0xff]
    %v226 = vld [vmem:[#allocation6 + $0x8] sm:$0xff]
    %v227 = vld [vmem:[#allocation7] sm:$0xff]
    %v228 = vld [vmem:[#allocation7 + $0x8] sm:$0xff]
    %v229 = vld [vmem:[#allocation7 + $0x10] sm:$0xff]
    %v230 = vld [vmem:[#allocation7 + $0x18] sm:$0xff]
    %v231 = vld [vmem:[#allocation8] sm:$0xff]
    %v232 = vld [vmem:[#allocation8 + $0x8] sm:$0xff]
    %v233 = vld [vmem:[#allocation8 + $0x10] sm:$0xff]
    %v234 = vld [vmem:[#allocation8 + $0x18] sm:$0xff]
    %v235 = vmul.f32 %v223, %v225
    %v236 = vmul.f32 %v224, %v226
    %v237 = vld [vmem:[%s0] sm:$0xff]
    %v238 = vld [vmem:[%s0 + $0x8] sm:$0xff]
    %v239 = vld [vmem:[%s1] sm:$0xff]
    %v240 = vld [vmem:[%s1 + $0x8] sm:$0xff]
    %242 = vset.pattern.permute.xlu0 0
    %243 = vperm.xlu0 %242, %v239
    %v244 = vpop.permute.xlu0 %243
    %247 = vset.pattern.permute.xlu0 0
    %248 = vperm.xlu0 %247, %v240
    %v249 = vpop.permute.xlu0 %248
    %vm251 = vcmask 130048
    %v253 = vsel %vm251, %v237, 0
    %v256 = vsel %vm251, %v238, 0
    %258 = vmatpush.msra.mxu0 0.0
    %259 = vmatpush.msra.mxu0 0.0
    %260 = vmatpush.msra.mxu0 0.0
    %261 = vmatpush.msra.mxu0 0.0
    %262 = vmatpush.msra.mxu0 0.0
    %263 = vmatpush.msra.mxu0 0.0
    %264 = vmatpush.msra.mxu0 0.0
    %265 = vmatpush.msra.mxu0 0.0
    %266 = vmatpush.msra.mxu0 0.0
    %267 = vmatpush.msra.mxu0 0.0
    %268 = vmatpush.msra.mxu0 0.0
    %269 = vmatpush.msra.mxu0 0.0
    %270 = vmatpush.msra.mxu0 0.0
    %271 = vmatpush.msra.mxu0 0.0
    %272 = vmatpush.msra.mxu0 %v236
    %273 = vmatpush.msra.mxu0 %v235
    %274 = vmatmul.f32.gmra.mxu0 %v253
    %v275 = vpop.f32.mrf.mxu0
    %v276 = vadd.f32 %v244, %v275
    %277 = vmatmul.f32.gmra.mxu0 %v256
    %v278 = vpop.f32.mrf.mxu0
    %v279 = vadd.f32 %v249, %v278
    %280 = vdwg.mxu0
    %v281 = vld [vmem:[%s2] sm:$0xff]
    %v282 = vld [vmem:[%s2 + $0x8] sm:$0xff]
    %v283 = vld [vmem:[%s2 + $0x10] sm:$0xff]
    %v284 = vld [vmem:[%s2 + $0x18] sm:$0xff]
    %v285 = vld [vmem:[%s3] sm:$0xff]
    %v286 = vld [vmem:[%s3 + $0x8] sm:$0xff]
    %v287 = vld [vmem:[%s3 + $0x10] sm:$0xff]
    %v288 = vld [vmem:[%s3 + $0x18] sm:$0xff]
    %vm289 = vcmask 261120
    %v291 = vsel %vm289, %v285, 0
    %v294 = vsel %vm289, %v286, 0
    %v297 = vsel %vm289, %v287, 0
    %v300 = vsel %vm289, %v288, 0
    %302 = vmatpush.msra.mxu0 0.0
    %303 = vmatpush.msra.mxu0 0.0
    %304 = vmatpush.msra.mxu0 0.0
    %305 = vmatpush.msra.mxu0 0.0
    %306 = vmatpush.msra.mxu0 0.0
    %307 = vmatpush.msra.mxu0 0.0
    %308 = vmatpush.msra.mxu0 0.0
    %309 = vmatpush.msra.mxu0 0.0
    %310 = vmatpush.msra.mxu0 0.0
    %311 = vmatpush.msra.mxu0 0.0
    %312 = vmatpush.msra.mxu0 0.0
    %313 = vmatpush.msra.mxu0 0.0
    %314 = vmatpush.msra.mxu0 %v234
    %315 = vmatpush.msra.mxu0 %v233
    %316 = vmatpush.msra.mxu0 %v232
    %317 = vmatpush.msra.mxu0 %v231
    %318 = vmatmul.f32.gmra.mxu0 %v291
    %v319 = vpop.f32.mrf.mxu0
    %v320 = vadd.f32 0.0, %v319
    %321 = vmatmul.f32.gmra.mxu0 %v294
    %v322 = vpop.f32.mrf.mxu0
    %v323 = vadd.f32 0.0, %v322
    %324 = vmatmul.f32.gmra.mxu0 %v297
    %v325 = vpop.f32.mrf.mxu0
    %v326 = vadd.f32 0.0, %v325
    %327 = vmatmul.f32.gmra.mxu0 %v300
    %v328 = vpop.f32.mrf.mxu0
    %v329 = vadd.f32 0.0, %v328
    %330 = vdwg.mxu0
    %v332 = vsel %vm289, %v281, 0
    %v335 = vsel %vm289, %v282, 0
    %v338 = vsel %vm289, %v283, 0
    %v341 = vsel %vm289, %v284, 0
    %343 = vmatpush.msra.mxu0 0.0
    %344 = vmatpush.msra.mxu0 0.0
    %345 = vmatpush.msra.mxu0 0.0
    %346 = vmatpush.msra.mxu0 0.0
    %347 = vmatpush.msra.mxu0 0.0
    %348 = vmatpush.msra.mxu0 0.0
    %349 = vmatpush.msra.mxu0 0.0
    %350 = vmatpush.msra.mxu0 0.0
    %351 = vmatpush.msra.mxu0 0.0
    %352 = vmatpush.msra.mxu0 0.0
    %353 = vmatpush.msra.mxu0 0.0
    %354 = vmatpush.msra.mxu0 0.0
    %355 = vmatpush.msra.mxu0 %v230
    %356 = vmatpush.msra.mxu0 %v229
    %357 = vmatpush.msra.mxu0 %v228
    %358 = vmatpush.msra.mxu0 %v227
    %359 = vmatmul.f32.gmra.mxu0 %v332
    %v360 = vpop.f32.mrf.mxu0
    %v361 = vadd.f32 %v320, %v360
    %362 = vmatmul.f32.gmra.mxu0 %v335
    %v363 = vpop.f32.mrf.mxu0
    %v364 = vadd.f32 %v323, %v363
    %365 = vmatmul.f32.gmra.mxu0 %v338
    %v366 = vpop.f32.mrf.mxu0
    %v367 = vadd.f32 %v326, %v366
    %368 = vmatmul.f32.gmra.mxu0 %v341
    %v369 = vpop.f32.mrf.mxu0
    %v370 = vadd.f32 %v329, %v369
    %371 = vdwg.mxu0
    %v372 = vld [vmem:[%s4] sm:$0xff]
    %v373 = vld [vmem:[%s4 + $0x8] sm:$0xff]
    %v374 = vld [vmem:[%s4 + $0x10] sm:$0xff]
    %v375 = vld [vmem:[%s4 + $0x18] sm:$0xff]
    %377 = vset.pattern.permute.xlu0 0
    %378 = vperm.xlu0 %377, %v372
    %v379 = vpop.permute.xlu0 %378
    %382 = vset.pattern.permute.xlu0 0
    %383 = vperm.xlu0 %382, %v373
    %v384 = vpop.permute.xlu0 %383
    %387 = vset.pattern.permute.xlu0 0
    %388 = vperm.xlu0 %387, %v374
    %v389 = vpop.permute.xlu0 %388
    %392 = vset.pattern.permute.xlu0 0
    %393 = vperm.xlu0 %392, %v375
    %v394 = vpop.permute.xlu0 %393
    %v396 = vadd.f32 %v361, %v379
    %v397 = vadd.f32 %v364, %v384
    %v398 = vadd.f32 %v367, %v389
    %v399 = vadd.f32 %v370, %v394
    %v400 = vmax.f32 %v396, 0.0
    %v401 = vmax.f32 %v397, 0.0
    %v402 = vmax.f32 %v398, 0.0
    %v403 = vmax.f32 %v399, 0.0
    %v404 = vld [vmem:[%s5] sm:$0xff]
    %v405 = vld [vmem:[%s5 + $0x8] sm:$0xff]
    %v406 = vld [vmem:[%s6] sm:$0xff]
    %v407 = vld [vmem:[%s6 + $0x8] sm:$0xff]
    %409 = vset.pattern.permute.xlu0 0
    %410 = vperm.xlu0 %409, %v406
    %v411 = vpop.permute.xlu0 %410
    %414 = vset.pattern.permute.xlu0 0
    %415 = vperm.xlu0 %414, %v407
    %v416 = vpop.permute.xlu0 %415
    %v419 = vsel %vm289, %v404, 0
    %v422 = vsel %vm289, %v405, 0
    %424 = vmatpush.msra.mxu0 0.0
    %425 = vmatpush.msra.mxu0 0.0
    %426 = vmatpush.msra.mxu0 0.0
    %427 = vmatpush.msra.mxu0 0.0
    %428 = vmatpush.msra.mxu0 0.0
    %429 = vmatpush.msra.mxu0 0.0
    %430 = vmatpush.msra.mxu0 0.0
    %431 = vmatpush.msra.mxu0 0.0
    %432 = vmatpush.msra.mxu0 0.0
    %433 = vmatpush.msra.mxu0 0.0
    %434 = vmatpush.msra.mxu0 0.0
    %435 = vmatpush.msra.mxu0 0.0
    %436 = vmatpush.msra.mxu0 %v403
    %437 = vmatpush.msra.mxu0 %v402
    %438 = vmatpush.msra.mxu0 %v401
    %439 = vmatpush.msra.mxu0 %v400
    %440 = vmatmul.f32.gmra.mxu0 %v419
    %v441 = vpop.f32.mrf.mxu0
    %v442 = vadd.f32 %v411, %v441
    %443 = vmatmul.f32.gmra.mxu0 %v422
    %v444 = vpop.f32.mrf.mxu0
    %v445 = vadd.f32 %v416, %v444
    %446 = vdwg.mxu0
    %v447 = vmax.f32 %v442, 0.0
    %v448 = vmax.f32 %v445, 0.0
    %v449 = vld [vmem:[%s7] sm:$0xff]
    %v450 = vld [vmem:[%s8] sm:$0xff]
    %452 = vset.pattern.permute.xlu0 0
    %453 = vperm.xlu0 %452, %v450
    %v454 = vpop.permute.xlu0 %453
    %v457 = vsel %vm251, %v449, 0
    %459 = vmatpush.msra.mxu0 0.0
    %460 = vmatpush.msra.mxu0 0.0
    %461 = vmatpush.msra.mxu0 0.0
    %462 = vmatpush.msra.mxu0 0.0
    %463 = vmatpush.msra.mxu0 0.0
    %464 = vmatpush.msra.mxu0 0.0
    %465 = vmatpush.msra.mxu0 0.0
    %466 = vmatpush.msra.mxu0 0.0
    %467 = vmatpush.msra.mxu0 0.0
    %468 = vmatpush.msra.mxu0 0.0
    %469 = vmatpush.msra.mxu0 0.0
    %470 = vmatpush.msra.mxu0 0.0
    %471 = vmatpush.msra.mxu0 0.0
    %472 = vmatpush.msra.mxu0 0.0
    %473 = vmatpush.msra.mxu0 %v448
    %474 = vmatpush.msra.mxu0 %v447
    %475 = vmatmul.f32.gmra.mxu0 %v457
    %v476 = vpop.f32.mrf.mxu0
    %v477 = vadd.f32 %v454, %v476
    %478 = vdwg.mxu0
    %v479 = vmax.f32 %v477, 0.0
    %v480 = vld [vmem:[%s9] sm:$0xff]
    %v481 = vld [vmem:[%s9 + $0x8] sm:$0xf]
    %v482 = vld [vmem:[%s10] sm:$0xff]
    %v483 = vld [vmem:[%s10 + $0x8] sm:$0xf]
    %vm484 = vcmask 64512
    %v486 = vsel %vm484, %v482, 0
    %v489 = vsel %vm484, %v483, 0
    %491 = vmatpush.msra.mxu0 0.0
    %492 = vmatpush.msra.mxu0 0.0
    %493 = vmatpush.msra.mxu0 0.0
    %494 = vmatpush.msra.mxu0 0.0
    %495 = vmatpush.msra.mxu0 0.0
    %496 = vmatpush.msra.mxu0 0.0
    %497 = vmatpush.msra.mxu0 0.0
    %498 = vmatpush.msra.mxu0 0.0
    %499 = vmatpush.msra.mxu0 0.0
    %500 = vmatpush.msra.mxu0 0.0
    %501 = vmatpush.msra.mxu0 0.0
    %502 = vmatpush.msra.mxu0 0.0
    %503 = vmatpush.msra.mxu0 0.0
    %504 = vmatpush.msra.mxu0 0.0
    %505 = vmatpush.msra.mxu0 0.0
    %506 = vmatpush.msra.mxu0 %v479
    %507 = vmatmul.f32.gmra.mxu0 %v486
    %v508 = vpop.f32.mrf.mxu0
    %v509 = vadd.f32 0.0, %v508
    %510 = vmatmul.f32.gmra.mxu0 %v489
    %v511 = vpop.f32.mrf.mxu0
    %v512 = vadd.f32 0.0, %v511
    %513 = vdwg.mxu0
    %v515 = vsel %vm251, %v480, 0
    %v518 = vsel %vm251, %v481, 0
    %520 = vmatpush.msra.mxu0 0.0
    %521 = vmatpush.msra.mxu0 0.0
    %522 = vmatpush.msra.mxu0 0.0
    %523 = vmatpush.msra.mxu0 0.0
    %524 = vmatpush.msra.mxu0 0.0
    %525 = vmatpush.msra.mxu0 0.0
    %526 = vmatpush.msra.mxu0 0.0
    %527 = vmatpush.msra.mxu0 0.0
    %528 = vmatpush.msra.mxu0 0.0
    %529 = vmatpush.msra.mxu0 0.0
    %530 = vmatpush.msra.mxu0 0.0
    %531 = vmatpush.msra.mxu0 0.0
    %532 = vmatpush.msra.mxu0 0.0
    %533 = vmatpush.msra.mxu0 0.0
    %534 = vmatpush.msra.mxu0 %v279
    %535 = vmatpush.msra.mxu0 %v276
    %536 = vmatmul.f32.gmra.mxu0 %v515
    %v537 = vpop.f32.mrf.mxu0
    %v538 = vadd.f32 %v509, %v537
    %539 = vmatmul.f32.gmra.mxu0 %v518
    %v540 = vpop.f32.mrf.mxu0
    %v541 = vadd.f32 %v512, %v540
    %542 = vdwg.mxu0
    %v543 = vld [vmem:[%s11] sm:$0xff]
    %v544 = vld [vmem:[%s11 + $0x8] sm:$0xf]
    %546 = vset.pattern.permute.xlu0 0
    %547 = vperm.xlu0 %546, %v543
    %v548 = vpop.permute.xlu0 %547
    %551 = vset.pattern.permute.xlu0 0
    %552 = vperm.xlu0 %551, %v544
    %v553 = vpop.permute.xlu0 %552
    %v555 = vadd.f32 %v538, %v548
    %v556 = vadd.f32 %v541, %v553
    %v557 = vmax.f32 %v555, 0.0
    %v558 = vmax.f32 %v556, 0.0
    %v559 = vld [vmem:[%s12] sm:$0x3f]
    %v560 = vld [vmem:[%s13] sm:$0x3f]
    %562 = vset.pattern.permute.xlu0 0
    %563 = vperm.xlu0 %562, %v560
    %v564 = vpop.permute.xlu0 %563
    %vm566 = vcmask 97280
    %v568 = vsel %vm566, %v559, 0
    %vm570 = vcmask 1043456
    %v572 = vsel %vm570, %v558, 0
    %574 = vmatpush.msra.mxu0 0.0
    %575 = vmatpush.msra.mxu0 0.0
    %576 = vmatpush.msra.mxu0 0.0
    %577 = vmatpush.msra.mxu0 0.0
    %578 = vmatpush.msra.mxu0 0.0
    %579 = vmatpush.msra.mxu0 0.0
    %580 = vmatpush.msra.mxu0 0.0
    %581 = vmatpush.msra.mxu0 0.0
    %582 = vmatpush.msra.mxu0 0.0
    %583 = vmatpush.msra.mxu0 0.0
    %584 = vmatpush.msra.mxu0 0.0
    %585 = vmatpush.msra.mxu0 0.0
    %586 = vmatpush.msra.mxu0 0.0
    %587 = vmatpush.msra.mxu0 0.0
    %588 = vmatpush.msra.mxu0 %v572
    %589 = vmatpush.msra.mxu0 %v557
    %590 = vmatmul.f32.gmra.mxu0 %v568
    %v591 = vpop.f32.mrf.mxu0
    %v592 = vadd.f32 %v564, %v591
    %593 = vdwg.mxu0
    %v594 = vmax.f32 %v592, 0.0
    %v595 = vld [vmem:[%s14] sm:$0x1]
    %v596 = vld [vmem:[#allocation2] sm:$0x1]
    %598 = vset.pattern.permute.xlu0 0
    %599 = vperm.xlu0 %598, %v596
    %v600 = vpop.permute.xlu0 %599
    %v602 = vperm.slane %v600, 0
    %vm603 = vcmask 48128
    %v605 = vsel %vm603, %v595, 0
    %vm607 = vcmask 1045504
    %v609 = vsel %vm607, %v594, 0
    %611 = vmatpush.msra.mxu0 0.0
    %612 = vmatpush.msra.mxu0 0.0
    %613 = vmatpush.msra.mxu0 0.0
    %614 = vmatpush.msra.mxu0 0.0
    %615 = vmatpush.msra.mxu0 0.0
    %616 = vmatpush.msra.mxu0 0.0
    %617 = vmatpush.msra.mxu0 0.0
    %618 = vmatpush.msra.mxu0 0.0
    %619 = vmatpush.msra.mxu0 0.0
    %620 = vmatpush.msra.mxu0 0.0
    %621 = vmatpush.msra.mxu0 0.0
    %622 = vmatpush.msra.mxu0 0.0
    %623 = vmatpush.msra.mxu0 0.0
    %624 = vmatpush.msra.mxu0 0.0
    %625 = vmatpush.msra.mxu0 0.0
    %626 = vmatpush.msra.mxu0 %v609
    %627 = vmatmul.f32.gmra.mxu0 %v605
    %v628 = vpop.f32.mrf.mxu0
    %v629 = vadd.f32 %v602, %v628
    %630 = vdwg.mxu0
    %v631 = vxor.u32 %v629, 2147483648
    %v632 = vmul.f32 %v631, 1.442695
    %v633 = vpow.pop %v632
    %v634 = vadd.f32 %v633, 1.0
    %v635 = vrcp.pop %v634
    %v636 = vmul.f32 %v634, %v635
    %v637 = vsub.f32 1.0, %v636
    %v638 = vmul.f32 %v635, %v637
    %v639 = vadd.f32 %v635, %v638
    %vm640 = vweird.f32 %v634
    %vm641 = vweird.f32 %v635
    %vm642 = vmor %vm640, %vm641
    %v643 = vsel %vm642, %v635, %v639
    %v644 = vand.u32 2147483647, %v634
    %vm645 = vcmp.eq.f32.partialorder %v644, 8.507059e+37
    %v646 = vand.u32 %v634, 2147483648
    %v647 = vor.u32 1.1754944e-38, %v646
    %v648 = vsel %vm645, %v647, %v643
    %v649 = vmul.f32 1.0, %v648
    %vm650 = vcmask 57344
    %651 = vst.msk [vmem:[#allocation3] sm:$0x1] %vm650, %v649
    // Predicated region
    $region98: #{_lambda_.2} parent=1 // pred_check
      _
    $region99: #{_lambda_.2} parent=1 // pred_check_branch
      %653 = sbr.rel (0) target = $region101
    $region100: #{_lambda_.2} parent=1 // pred_region
      %655 = vsyncadd [#allocation4], 0
      %s657 = sshll.u32 [#allocation3], 4
      %s658 = int_to_ptr.vmem [resolvable:$true] %s657
      %s659 = sshll.u32 %s23, 4
      %s660 = int_to_ptr.hbm [resolvable:$true] %s659
      %662 = dma.vmem_to_hbm [thread:$0]  %s658, 16, %s660, [#allocation4]
    $region101: #{_lambda_.2} parent=1 // pred_fallthru
      _
    // Predicated region
    $region102: #{_lambda_.2} parent=1 // pred_check
      _
    $region103: #{_lambda_.2} parent=1 // pred_check_branch
      %664 = sbr.rel (0) target = $region105
    $region104: #{_lambda_.2} parent=1 // pred_region
      %666 = dma.done [#allocation4], 16
    $region105: #{_lambda_.2} parent=1 // pred_fallthru
      _
    %667 = vsyncpa [#allocation4], 1

</llo_original>
